<compile_context>
chip_gen: v7x
topology: tpu7x:2x2x1
jax: 0.10.0
libtpu: 0.0.40
codegen_flags: <defaults>
</compile_context>

<pallas_src>
from functools import partial

import jax
import jax.numpy as jnp
from jax.experimental import pallas as pl
from jax.experimental.pallas import tpu as pltpu


# -----------------------------------------------------------------------------
# Pallas kernel: one fused matmul per M-tile.
#   patches (TM, K) @ w_mat (K, Cout) -> out (TM, Cout), accumulate in f32.
# Bias and the residual broadcast-add are already folded into w_mat / patches
# (constant-1 bias column; +identity block on the centre-tap rows).
# -----------------------------------------------------------------------------
def _fused_matmul_kernel(p_ref, w_ref, o_ref):
    o_ref[...] = jnp.dot(
        p_ref[...], w_ref[...], preferred_element_type=jnp.float32
    ).astype(o_ref.dtype)


def _round_up(x, m):
    return ((x + m - 1) // m) * m


def fused_conv_matmul(patches, w_mat, *, tm=512):
    """patches: (M, K) f32, w_mat: (K, Cout) f32  ->  (M, Cout) f32."""
    M, K = patches.shape
    Cout = w_mat.shape[1]

    # Clamp the tile so tiny problems don't force a huge padded HBM buffer,
    # but keep the (8, 128)-friendly granularity.
    tm = max(128, min(tm, _round_up(M, 256)))
    grid_m = pl.cdiv(M, tm)
    m_pad = grid_m * tm
    if m_pad != M:
        patches = jnp.pad(patches, ((0, m_pad - M), (0, 0)))

    cost = pl.CostEstimate(
        flops=2 * m_pad * K * Cout,
        transcendentals=0,
        bytes_accessed=4 * (m_pad * K + K * Cout + m_pad * Cout),
    )

    out = pl.pallas_call(
        _fused_matmul_kernel,
        out_shape=jax.ShapeDtypeStruct((m_pad, Cout), jnp.float32),
        grid=(grid_m,),
        in_specs=[
            pl.BlockSpec((tm, K), lambda i: (i, 0)),
            pl.BlockSpec((K, Cout), lambda i: (0, 0)),   # weights stay resident
        ],
        out_specs=pl.BlockSpec((tm, Cout), lambda i: (i, 0)),
        compiler_params=pltpu.CompilerParams(
            dimension_semantics=("parallel",)),
        cost_estimate=cost,
    )(patches, w_mat)
    return out[:M]


# -----------------------------------------------------------------------------
# Wrapper-side im2col (layout-only glue).  Causal time pad + spatial halo are
# folded into the same pass; bias column and lane padding are appended so the
# kernel sees an aligned, lane-dense (M, 256) LHS.
# -----------------------------------------------------------------------------
def _build_patches(x_ncdhw, *, causal, k, k_pad):
    """NCDHW input -> im2col matrix (B*D*H*W, k_pad); column k^3*C is all-ones
    (bias column), remaining columns up to k_pad are zero padding."""
    B, C, D, H, W = x_ncdhw.shape
    x = jnp.transpose(x_ncdhw, (0, 2, 3, 4, 1))                    # NDHWC
    if causal:
        front = jnp.repeat(x[:, :1], k - 1, axis=1)
        x = jnp.concatenate([front, x], axis=1)
    else:
        front = jnp.repeat(x[:, :1], (k - 1) // 2, axis=1)
        back = jnp.repeat(x[:, -1:], (k - 1) // 2, axis=1)
        x = jnp.concatenate([front, x, back], axis=1)
    hp = k // 2
    x = jnp.pad(x, ((0, 0), (0, 0), (hp, hp), (hp, hp), (0, 0)))   # H/W zero halo

    cols = []
    for kt in range(k):
        for kh in range(k):
            for kw in range(k):
                cols.append(x[:, kt:kt + D, kh:kh + H, kw:kw + W, :])
    k_real = k * k * k * C
    cols.append(jnp.ones((B, D, H, W, 1), x.dtype))                # bias column
    if k_pad > k_real + 1:
        cols.append(jnp.zeros((B, D, H, W, k_pad - k_real - 1), x.dtype))
    patches = jnp.concatenate(cols, axis=-1)                       # (B,D,H,W,k_pad)
    return patches.reshape(B * D * H * W, k_pad)


def _build_weight_matrix(weight_oidhw, bias, *, cin, cout, stride, residual,
                         causal, k, k_pad):
    """(Cout, Cin, kt, kh, kw) -> (k_pad, Cout) matrix with bias row and the
    residual identity block fused in."""
    k_real = k * k * k * cin
    w = jnp.transpose(weight_oidhw, (2, 3, 4, 1, 0)).reshape(k_real, cout)
    w_full = jnp.zeros((k_pad, cout), dtype=jnp.float32)
    w_full = w_full.at[:k_real, :].set(w.astype(jnp.float32))
    w_full = w_full.at[k_real, :].set(bias.astype(jnp.float32))    # pairs w/ 1-col
    if residual:
        p_total = stride[0] * stride[1] * stride[2]
        assert cin % p_total == 0, \
            "residual path needs in_channels % prod(stride) == 0"
        c0 = cin // p_total                 # channels of depth_to_space(x)
        centre_kt = (k - 1) if causal else (k - 1) // 2   # tap reading frame d
        centre = ((centre_kt * k + k // 2) * k + k // 2) * cin
        o = jnp.arange(cout)
        # output channel o = c*P + j gets residual from x channel
        # (c mod c0)*P + j  (== o mod P for the in_channels=8, P=8 config)
        src = ((o // p_total) % c0) * p_total + (o % p_total)
        w_full = w_full.at[centre + src, o].add(1.0)
    return w_full


def _depth_to_space_from_channels_last(y, stride):
    """(B, D, H, W, C) -> (B, C/(p1*p2*p3), D*p1, H*p2, W*p3)."""
    B, D, H, W, C = y.shape
    p1, p2, p3 = stride
    c = C // (p1 * p2 * p3)
    y = y.reshape(B, D, H, W, c, p1, p2, p3)
    y = jnp.transpose(y, (0, 4, 1, 5, 2, 6, 3, 7))
    return y.reshape(B, c, D * p1, H * p2, W * p3)


def depth_to_space_upsample_forward(x, weight_oidhw, bias, *, stride=(2, 2, 2),
                                    residual=True,
                                    out_channels_reduction_factor=1,
                                    causal=True, tm=512):
    """x: (B, Cin, D, H, W) f32 (PyTorch NCDHW); weight: (Cout, Cin, 3, 3, 3)."""
    B, Cin, D, H, W = x.shape
    k = weight_oidhw.shape[-1]
    p1, p2, p3 = stride
    p_total = p1 * p2 * p3
    Cout = weight_oidhw.shape[0]
    assert Cout == p_total * Cin // out_channels_reduction_factor
    k_real = k * k * k * Cin
    k_pad = ((k_real + 1 + 127) // 128) * 128        # +1 for the bias column

    patches = _build_patches(x, causal=causal, k=k, k_pad=k_pad)      # (M, k_pad)
    w_mat = _build_weight_matrix(
        weight_oidhw, bias, cin=Cin, cout=Cout, stride=stride,
        residual=residual, causal=causal, k=k, k_pad=k_pad)           # (k_pad, Cout)

    y = fused_conv_matmul(patches, w_mat, tm=tm)                      # (M, Cout)
    y = y.reshape(B, D, H, W, Cout)                                   # bitcast-free
    y = _depth_to_space_from_channels_last(y, stride)
    if p1 == 2:
        y = y[:, :, 1:, :, :]          # temporal crop (residual already fused)
    return y


# -----------------------------------------------------------------------------
# Pure-JAX reference of the full module forward (correctness check).
# -----------------------------------------------------------------------------
def _depth_to_space_ncdhw(x, stride):
    B, C, D, H, W = x.shape
    p1, p2, p3 = stride
    c = C // (p1 * p2 * p3)
    y = x.reshape(B, c, p1, p2, p3, D, H, W)
    y = jnp.transpose(y, (0, 1, 5, 2, 6, 3, 7, 4))
    return y.reshape(B, c, D * p1, H * p2, W * p3)


def _reference_forward(x, weight_oidhw, bias, *, stride, residual,
                       out_channels_reduction_factor, causal):
    k = weight_oidhw.shape[-1]
    p1, p2, p3 = stride
    if residual:
        x_in = _depth_to_space_ncdhw(x, stride)
        num_repeat = (p1 * p2 * p3) // out_channels_reduction_factor
        x_in = jnp.tile(x_in, (1, num_repeat, 1, 1, 1))
        if p1 == 2:
            x_in = x_in[:, :, 1:, :, :]
    if causal:
        front = jnp.repeat(x[:, :, :1], k - 1, axis=2)
        x_t = jnp.concatenate([front, x], axis=2)
    else:
        front = jnp.repeat(x[:, :, :1], (k - 1) // 2, axis=2)
        back = jnp.repeat(x[:, :, -1:], (k - 1) // 2, axis=2)
        x_t = jnp.concatenate([front, x, back], axis=2)
    y = jax.lax.conv_general_dilated(
        x_t, weight_oidhw, window_strides=(1, 1, 1),
        padding=((0, 0), (k // 2, k // 2), (k // 2, k // 2)),
        dimension_numbers=("NCDHW", "OIDHW", "NCDHW"),
        precision=jax.lax.Precision.HIGHEST)
    y = y + bias[None, :, None, None, None]
    y = _depth_to_space_ncdhw(y, stride)
    if p1 == 2:
        y = y[:, :, 1:, :, :]
    if residual:
        y = y + x_in
    return y


if __name__ == "__main__":
    # Module config: dims=3, in_channels=8, stride=(2,2,2), residual=True
    B, Cin, D, H, W = 2, 8, 4, 8, 8
    stride = (2, 2, 2)
    reduction = 1
    Cout = stride[0] * stride[1] * stride[2] * Cin // reduction   # 64

    key = jax.random.PRNGKey(0)
    kx, kw, kb = jax.random.split(key, 3)
    x = jax.random.normal(kx, (B, Cin, D, H, W), dtype=jnp.float32)
    fan_in = Cin * 3 * 3 * 3
    weight = jax.random.normal(kw, (Cout, Cin, 3, 3, 3), dtype=jnp.float32) / jnp.sqrt(fan_in)
    bias = (jax.random.uniform(kb, (Cout,), dtype=jnp.float32) - 0.5) / jnp.sqrt(fan_in)

    fwd = jax.jit(partial(
        depth_to_space_upsample_forward, stride=stride, residual=True,
        out_channels_reduction_factor=reduction, causal=True, tm=512))
    out = jax.block_until_ready(fwd(x, weight, bias))

    ref = jax.block_until_ready(_reference_forward(
        x, weight, bias, stride=stride, residual=True,
        out_channels_reduction_factor=reduction, causal=True))

    assert out.shape == (B, Cin, D * 2 - 1, H * 2, W * 2), out.shape
    max_err = float(jnp.max(jnp.abs(out - ref)))
    assert jnp.allclose(out, ref, atol=1e-3, rtol=1e-3), f"mismatch, max_err={max_err}"

    print("KERNEL_OK")
</pallas_src>

<mosaic_0001>
module attributes {stable_mosaic.version = 11 : i64} {
  func.func private @main(%arg0: i32) attributes {dimension_semantics = [#tpu.dimension_semantics<core_parallel>], iteration_bounds = array<i64: 2>, tpu.core_type = #tpu.core_type<sc_scalar_subcore>, window_params = []} {
    return
  }
}

module attributes {stable_mosaic.version = 11 : i64} {
  func.func private @main(%arg0: i32) attributes {dimension_semantics = [#tpu.dimension_semantics<core_parallel>], iteration_bounds = array<i64: 2>, tpu.core_type = #tpu.core_type<sc_scalar_subcore>, window_params = []} {
    return
  }
}

module attributes {stable_mosaic.version = 11 : i64} {
  func.func @_fused_matmul_kernel(%arg0: i32, %arg1: memref<512x256xf32, #tpu.memory_space<vmem>>, %arg2: memref<256x64xf32, #tpu.memory_space<vmem>>, %arg3: memref<512x64xf32, #tpu.memory_space<vmem>>) attributes {dimension_semantics = [#tpu.dimension_semantics<parallel>], iteration_bounds = array<i64: 1>, scalar_prefetch = 0 : i64, scratch_operands = 0 : i64, tpu.core_type = #tpu.core_type<tc>, window_params = [{transform_indices = @transform_0, window_bounds = array<i64: 512, 256>}, {pipeline_mode = #tpu.pipeline_mode<synchronous>, transform_indices = @transform_1, window_bounds = array<i64: 256, 64>}, {transform_indices = @transform_2, window_bounds = array<i64: 512, 64>}]} {
    %c0 = arith.constant 0 : index
    %c0_0 = arith.constant 0 : index
    %0 = vector.load %arg1[%c0, %c0_0] : memref<512x256xf32, #tpu.memory_space<vmem>>, vector<512x256xf32>
    %c0_1 = arith.constant 0 : index
    %c0_2 = arith.constant 0 : index
    %1 = vector.load %arg2[%c0_1, %c0_2] : memref<256x64xf32, #tpu.memory_space<vmem>>, vector<256x64xf32>
    %cst = arith.constant dense<0.000000e+00> : vector<512x64xf32>
    %2 = tpu.matmul %0, %1, %cst {dimension_numbers = #tpu.dot_dimension_numbers<[1], [0], [0], [1], [0, 0, 1, 1], [], []>} : vector<512x256xf32>, vector<256x64xf32>, vector<512x64xf32> -> vector<512x64xf32>
    %c0_3 = arith.constant 0 : index
    %c0_4 = arith.constant 0 : index
    %3 = vector.load %arg3[%c0_3, %c0_4] : memref<512x64xf32, #tpu.memory_space<vmem>>, vector<512x64xf32>
    tpu.vector_store %arg3[%c0_3, %c0_4], %2 {strides = array<i32>} : memref<512x64xf32, #tpu.memory_space<vmem>>, vector<512x64xf32>,
    return
  }
  func.func @transform_0(%arg0: i32) -> (i32, i32) {
    %c0_i32 = arith.constant 0 : i32
    %c0_i32_0 = arith.constant 0 : i32
    return %arg0, %c0_i32 : i32, i32
  }
  func.func @transform_1(%arg0: i32) -> (i32, i32) {
    %c0_i32 = arith.constant 0 : i32
    %c0_i32_0 = arith.constant 0 : i32
    %c0_i32_1 = arith.constant 0 : i32
    return %c0_i32, %c0_i32_0 : i32, i32
  }
  func.func @transform_2(%arg0: i32) -> (i32, i32) {
    %c0_i32 = arith.constant 0 : i32
    %c0_i32_0 = arith.constant 0 : i32
    return %arg0, %c0_i32 : i32, i32
  }
}

</mosaic_0001>

<llo_original>
// kernel: depth_to_space_upsample_forward.1
$region0: #{depth_to_space_upsample_forward.1}
  #allocation0 [shape = 'u32[]', space=smem, size = 0x4, offset = 0x4, fixed_abs, tag = 'smem constant byte address 0x4 - core index']
  #allocation1 [shape = 'u32[144,128]{1,0:T(1,128)}', space=vmem, size = 0x12000, scoped, tag = 'internal scratch']
  %s0 = inlined_call_operand.vmem [shape: f32[512,256], index: 0, kind: input, shape index: {}]
  %s1 = inlined_call_operand.vmem [shape: f32[256,64], index: 1, kind: input, shape index: {}]
  %s2 = inlined_call_operand.vmem [shape: f32[512,64], index: 2, kind: output, shape index: {}]
  %s3 = sld [smem:[#allocation0]]
  $region18: #{depth_to_space_upsample_forward.1} parent=0
    _
  %s5 = ssub.s32 1, %s3
  %s6 = scalar_select 0, %s5, %s3
  // Predicated region
  $region2: #{depth_to_space_upsample_forward.1} parent=0 // pred_check
    _
  $region3: #{depth_to_space_upsample_forward.1} parent=0 // pred_check_branch
    %8 = sbr.rel (0) target = $region5
  $region4: #{depth_to_space_upsample_forward.1} parent=0 // pred_region
    _
  $region5: #{depth_to_space_upsample_forward.1} parent=0 // pred_fallthru
    _
  // Predicated region
  $region6: #{depth_to_space_upsample_forward.1} parent=0 // pred_check
    _
  $region7: #{depth_to_space_upsample_forward.1} parent=0 // pred_check_branch
    %10 = sbr.rel (0) target = $region9
  $region8: #{depth_to_space_upsample_forward.1} parent=0 // pred_region
    _
  $region9: #{depth_to_space_upsample_forward.1} parent=0 // pred_fallthru
    _
  %v11 = vld [vmem:[%s0] sm:$0xff]
  %v12 = vld [vmem:[%s0 + $0x8] sm:$0xff]
  %v13 = vld [vmem:[%s0 + $0x10] sm:$0xff]
  %v14 = vld [vmem:[%s0 + $0x18] sm:$0xff]
  %v15 = vld [vmem:[%s0 + $0x20] sm:$0xff]
  %v16 = vld [vmem:[%s0 + $0x28] sm:$0xff]
  %v17 = vld [vmem:[%s0 + $0x30] sm:$0xff]
  %v18 = vld [vmem:[%s0 + $0x38] sm:$0xff]
  %v19 = vld [vmem:[%s0 + $0x40] sm:$0xff]
  %v20 = vld [vmem:[%s0 + $0x48] sm:$0xff]
  %v21 = vld [vmem:[%s0 + $0x50] sm:$0xff]
  %v22 = vld [vmem:[%s0 + $0x58] sm:$0xff]
  %v23 = vld [vmem:[%s0 + $0x60] sm:$0xff]
  %v24 = vld [vmem:[%s0 + $0x68] sm:$0xff]
  %v25 = vld [vmem:[%s0 + $0x70] sm:$0xff]
  %v26 = vld [vmem:[%s0 + $0x78] sm:$0xff]
  %v27 = vld [vmem:[%s0 + $0x80] sm:$0xff]
  %v28 = vld [vmem:[%s0 + $0x88] sm:$0xff]
  %v29 = vld [vmem:[%s0 + $0x90] sm:$0xff]
  %v30 = vld [vmem:[%s0 + $0x98] sm:$0xff]
  %v31 = vld [vmem:[%s0 + $0xa0] sm:$0xff]
  %v32 = vld [vmem:[%s0 + $0xa8] sm:$0xff]
  %v33 = vld [vmem:[%s0 + $0xb0] sm:$0xff]
  %v34 = vld [vmem:[%s0 + $0xb8] sm:$0xff]
  %v35 = vld [vmem:[%s0 + $0xc0] sm:$0xff]
  %v36 = vld [vmem:[%s0 + $0xc8] sm:$0xff]
  %v37 = vld [vmem:[%s0 + $0xd0] sm:$0xff]
  %v38 = vld [vmem:[%s0 + $0xd8] sm:$0xff]
  %v39 = vld [vmem:[%s0 + $0xe0] sm:$0xff]
  %v40 = vld [vmem:[%s0 + $0xe8] sm:$0xff]
  %v41 = vld [vmem:[%s0 + $0xf0] sm:$0xff]
  %v42 = vld [vmem:[%s0 + $0xf8] sm:$0xff]
  %v43 = vld [vmem:[%s0 + $0x100] sm:$0xff]
  %v44 = vld [vmem:[%s0 + $0x108] sm:$0xff]
  %v45 = vld [vmem:[%s0 + $0x110] sm:$0xff]
  %v46 = vld [vmem:[%s0 + $0x118] sm:$0xff]
  %v47 = vld [vmem:[%s0 + $0x120] sm:$0xff]
  %v48 = vld [vmem:[%s0 + $0x128] sm:$0xff]
  %v49 = vld [vmem:[%s0 + $0x130] sm:$0xff]
  %v50 = vld [vmem:[%s0 + $0x138] sm:$0xff]
  %v51 = vld [vmem:[%s0 + $0x140] sm:$0xff]
  %v52 = vld [vmem:[%s0 + $0x148] sm:$0xff]
  %v53 = vld [vmem:[%s0 + $0x150] sm:$0xff]
  %v54 = vld [vmem:[%s0 + $0x158] sm:$0xff]
  %v55 = vld [vmem:[%s0 + $0x160] sm:$0xff]
  %v56 = vld [vmem:[%s0 + $0x168] sm:$0xff]
  %v57 = vld [vmem:[%s0 + $0x170] sm:$0xff]
  %v58 = vld [vmem:[%s0 + $0x178] sm:$0xff]
  %v59 = vld [vmem:[%s0 + $0x180] sm:$0xff]
  %v60 = vld [vmem:[%s0 + $0x188] sm:$0xff]
  %v61 = vld [vmem:[%s0 + $0x190] sm:$0xff]
  %v62 = vld [vmem:[%s0 + $0x198] sm:$0xff]
  %v63 = vld [vmem:[%s0 + $0x1a0] sm:$0xff]
  %v64 = vld [vmem:[%s0 + $0x1a8] sm:$0xff]
  %v65 = vld [vmem:[%s0 + $0x1b0] sm:$0xff]
  %v66 = vld [vmem:[%s0 + $0x1b8] sm:$0xff]
  %v67 = vld [vmem:[%s0 + $0x1c0] sm:$0xff]
  %v68 = vld [vmem:[%s0 + $0x1c8] sm:$0xff]
  %v69 = vld [vmem:[%s0 + $0x1d0] sm:$0xff]
  %v70 = vld [vmem:[%s0 + $0x1d8] sm:$0xff]
  %v71 = vld [vmem:[%s0 + $0x1e0] sm:$0xff]
  %v72 = vld [vmem:[%s0 + $0x1e8] sm:$0xff]
  %v73 = vld [vmem:[%s0 + $0x1f0] sm:$0xff]
  %v74 = vld [vmem:[%s0 + $0x1f8] sm:$0xff]
  %v75 = vld [vmem:[%s0 + $0x200] sm:$0xff]
  %v76 = vld [vmem:[%s0 + $0x208] sm:$0xff]
  %v77 = vld [vmem:[%s0 + $0x210] sm:$0xff]
  %v78 = vld [vmem:[%s0 + $0x218] sm:$0xff]
  %v79 = vld [vmem:[%s0 + $0x220] sm:$0xff]
  %v80 = vld [vmem:[%s0 + $0x228] sm:$0xff]
  %v81 = vld [vmem:[%s0 + $0x230] sm:$0xff]
  %v82 = vld [vmem:[%s0 + $0x238] sm:$0xff]
  %v83 = vld [vmem:[%s0 + $0x240] sm:$0xff]
  %v84 = vld [vmem:[%s0 + $0x248] sm:$0xff]
  %v85 = vld [vmem:[%s0 + $0x250] sm:$0xff]
  %v86 = vld [vmem:[%s0 + $0x258] sm:$0xff]
  %v87 = vld [vmem:[%s0 + $0x260] sm:$0xff]
  %v88 = vld [vmem:[%s0 + $0x268] sm:$0xff]
  %v89 = vld [vmem:[%s0 + $0x270] sm:$0xff]
  %v90 = vld [vmem:[%s0 + $0x278] sm:$0xff]
  %v91 = vld [vmem:[%s0 + $0x280] sm:$0xff]
  %v92 = vld [vmem:[%s0 + $0x288] sm:$0xff]
  %v93 = vld [vmem:[%s0 + $0x290] sm:$0xff]
  %v94 = vld [vmem:[%s0 + $0x298] sm:$0xff]
  %v95 = vld [vmem:[%s0 + $0x2a0] sm:$0xff]
  %v96 = vld [vmem:[%s0 + $0x2a8] sm:$0xff]
  %v97 = vld [vmem:[%s0 + $0x2b0] sm:$0xff]
  %v98 = vld [vmem:[%s0 + $0x2b8] sm:$0xff]
  %v99 = vld [vmem:[%s0 + $0x2c0] sm:$0xff]
  %v100 = vld [vmem:[%s0 + $0x2c8] sm:$0xff]
  %v101 = vld [vmem:[%s0 + $0x2d0] sm:$0xff]
  %v102 = vld [vmem:[%s0 + $0x2d8] sm:$0xff]
  %v103 = vld [vmem:[%s0 + $0x2e0] sm:$0xff]
  %v104 = vld [vmem:[%s0 + $0x2e8] sm:$0xff]
  %v105 = vld [vmem:[%s0 + $0x2f0] sm:$0xff]
  %v106 = vld [vmem:[%s0 + $0x2f8] sm:$0xff]
  %v107 = vld [vmem:[%s0 + $0x300] sm:$0xff]
  %v108 = vld [vmem:[%s0 + $0x308] sm:$0xff]
  %v109 = vld [vmem:[%s0 + $0x310] sm:$0xff]
  %v110 = vld [vmem:[%s0 + $0x318] sm:$0xff]
  %v111 = vld [vmem:[%s0 + $0x320] sm:$0xff]
  %v112 = vld [vmem:[%s0 + $0x328] sm:$0xff]
  %v113 = vld [vmem:[%s0 + $0x330] sm:$0xff]
  %v114 = vld [vmem:[%s0 + $0x338] sm:$0xff]
  %v115 = vld [vmem:[%s0 + $0x340] sm:$0xff]
  %v116 = vld [vmem:[%s0 + $0x348] sm:$0xff]
  %v117 = vld [vmem:[%s0 + $0x350] sm:$0xff]
  %v118 = vld [vmem:[%s0 + $0x358] sm:$0xff]
  %v119 = vld [vmem:[%s0 + $0x360] sm:$0xff]
  %v120 = vld [vmem:[%s0 + $0x368] sm:$0xff]
  %v121 = vld [vmem:[%s0 + $0x370] sm:$0xff]
  %v122 = vld [vmem:[%s0 + $0x378] sm:$0xff]
  %v123 = vld [vmem:[%s0 + $0x380] sm:$0xff]
  %v124 = vld [vmem:[%s0 + $0x388] sm:$0xff]
  %v125 = vld [vmem:[%s0 + $0x390] sm:$0xff]
  %v126 = vld [vmem:[%s0 + $0x398] sm:$0xff]
  %v127 = vld [vmem:[%s0 + $0x3a0] sm:$0xff]
  %v128 = vld [vmem:[%s0 + $0x3a8] sm:$0xff]
  %v129 = vld [vmem:[%s0 + $0x3b0] sm:$0xff]
  %v130 = vld [vmem:[%s0 + $0x3b8] sm:$0xff]
  %v131 = vld [vmem:[%s0 + $0x3c0] sm:$0xff]
  %v132 = vld [vmem:[%s0 + $0x3c8] sm:$0xff]
  %v133 = vld [vmem:[%s0 + $0x3d0] sm:$0xff]
  %v134 = vld [vmem:[%s0 + $0x3d8] sm:$0xff]
  %v135 = vld [vmem:[%s0 + $0x3e0] sm:$0xff]
  %v136 = vld [vmem:[%s0 + $0x3e8] sm:$0xff]
  %v137 = vld [vmem:[%s0 + $0x3f0] sm:$0xff]
  %v138 = vld [vmem:[%s0 + $0x3f8] sm:$0xff]
  %v139 = vld [vmem:[%s1] sm:$0xff]
  %v140 = vld [vmem:[%s1 + $0x8] sm:$0xff]
  %v141 = vld [vmem:[%s1 + $0x10] sm:$0xff]
  %v142 = vld [vmem:[%s1 + $0x18] sm:$0xff]
  %v143 = vld [vmem:[%s1 + $0x20] sm:$0xff]
  %v144 = vld [vmem:[%s1 + $0x28] sm:$0xff]
  %v145 = vld [vmem:[%s1 + $0x30] sm:$0xff]
  %v146 = vld [vmem:[%s1 + $0x38] sm:$0xff]
  %v147 = vld [vmem:[%s1 + $0x40] sm:$0xff]
  %v148 = vld [vmem:[%s1 + $0x48] sm:$0xff]
  %v149 = vld [vmem:[%s1 + $0x50] sm:$0xff]
  %v150 = vld [vmem:[%s1 + $0x58] sm:$0xff]
  %v151 = vld [vmem:[%s1 + $0x60] sm:$0xff]
  %v152 = vld [vmem:[%s1 + $0x68] sm:$0xff]
  %v153 = vld [vmem:[%s1 + $0x70] sm:$0xff]
  %v154 = vld [vmem:[%s1 + $0x78] sm:$0xff]
  %v155 = vld [vmem:[%s1 + $0x80] sm:$0xff]
  %v156 = vld [vmem:[%s1 + $0x88] sm:$0xff]
  %v157 = vld [vmem:[%s1 + $0x90] sm:$0xff]
  %v158 = vld [vmem:[%s1 + $0x98] sm:$0xff]
  %v159 = vld [vmem:[%s1 + $0xa0] sm:$0xff]
  %v160 = vld [vmem:[%s1 + $0xa8] sm:$0xff]
  %v161 = vld [vmem:[%s1 + $0xb0] sm:$0xff]
  %v162 = vld [vmem:[%s1 + $0xb8] sm:$0xff]
  %v163 = vld [vmem:[%s1 + $0xc0] sm:$0xff]
  %v164 = vld [vmem:[%s1 + $0xc8] sm:$0xff]
  %v165 = vld [vmem:[%s1 + $0xd0] sm:$0xff]
  %v166 = vld [vmem:[%s1 + $0xd8] sm:$0xff]
  %v167 = vld [vmem:[%s1 + $0xe0] sm:$0xff]
  %v168 = vld [vmem:[%s1 + $0xe8] sm:$0xff]
  %v169 = vld [vmem:[%s1 + $0xf0] sm:$0xff]
  %v170 = vld [vmem:[%s1 + $0xf8] sm:$0xff]
  %171 = vmatprep.subr.mxu0 0.0
  %172 = vmatpush1.msra.mxu0 %v139
  %173 = vmatprep.subr.mxu0 0.0
  %174 = vmatpush1.msra.mxu0 %v140
  %175 = vmatprep.subr.mxu0 0.0
  %176 = vmatpush1.msra.mxu0 %v141
  %177 = vmatprep.subr.mxu0 0.0
  %178 = vmatpush1.msra.mxu0 %v142
  %179 = vmatprep.subr.mxu0 0.0
  %180 = vmatpush1.msra.mxu0 %v143
  %181 = vmatprep.subr.mxu0 0.0
  %182 = vmatpush1.msra.mxu0 %v144
  %183 = vmatprep.subr.mxu0 0.0
  %184 = vmatpush1.msra.mxu0 %v145
  %185 = vmatprep.subr.mxu0 0.0
  %186 = vmatpush1.msra.mxu0 %v146
  %187 = vmatprep.subr.mxu0 0.0
  %188 = vmatpush1.msra.mxu0 %v147
  %189 = vmatprep.subr.mxu0 0.0
  %190 = vmatpush1.msra.mxu0 %v148
  %191 = vmatprep.subr.mxu0 0.0
  %192 = vmatpush1.msra.mxu0 %v149
  %193 = vmatprep.subr.mxu0 0.0
  %194 = vmatpush1.msra.mxu0 %v150
  %195 = vmatprep.subr.mxu0 0.0
  %196 = vmatpush1.msra.mxu0 %v151
  %197 = vmatprep.subr.mxu0 0.0
  %198 = vmatpush1.msra.mxu0 %v152
  %199 = vmatprep.subr.mxu0 0.0
  %200 = vmatpush1.msra.mxu0 %v153
  %201 = vmatprep.subr.mxu0 0.0
  %202 = vmatpush1.msra.mxu0 %v154
  %203 = vmatprep.subr.mxu0 0.0
  %204 = vmatpush1.msra.mxu0 %v155
  %205 = vmatprep.subr.mxu0 0.0
  %206 = vmatpush1.msra.mxu0 %v156
  %207 = vmatprep.subr.mxu0 0.0
  %208 = vmatpush1.msra.mxu0 %v157
  %209 = vmatprep.subr.mxu0 0.0
  %210 = vmatpush1.msra.mxu0 %v158
  %211 = vmatprep.subr.mxu0 0.0
  %212 = vmatpush1.msra.mxu0 %v159
  %213 = vmatprep.subr.mxu0 0.0
  %214 = vmatpush1.msra.mxu0 %v160
  %215 = vmatprep.subr.mxu0 0.0
  %216 = vmatpush1.msra.mxu0 %v161
  %217 = vmatprep.subr.mxu0 0.0
  %218 = vmatpush1.msra.mxu0 %v162
  %219 = vmatprep.subr.mxu0 0.0
  %220 = vmatpush1.msra.mxu0 %v163
  %221 = vmatprep.subr.mxu0 0.0
  %222 = vmatpush1.msra.mxu0 %v164
  %223 = vmatprep.subr.mxu0 0.0
  %224 = vmatpush1.msra.mxu0 %v165
  %225 = vmatprep.subr.mxu0 0.0
  %226 = vmatpush1.msra.mxu0 %v166
  %227 = vmatprep.subr.mxu0 0.0
  %228 = vmatpush1.msra.mxu0 %v167
  %229 = vmatprep.subr.mxu0 0.0
  %230 = vmatpush1.msra.mxu0 %v168
  %231 = vmatprep.subr.mxu0 0.0
  %232 = vmatpush1.msra.mxu0 %v169
  %233 = vmatprep.subr.mxu0 0.0
  %234 = vmatpush1.msra.mxu0 %v170
  %235 = vmatprep.mubr.f32.mxu0 %v12
  %236 = vmatmul.mubr.f32.gmra.mrb[0].mxu0 %v11
  %v237 = vpop.f32.mrb[0].mxu0
  %v238 = vadd.f32 0.0, %v237
  %v239 = vpop.f32.mrb[0].mxu0
  %240 = vmatprep.mubr.f32.mxu0 %v14
  %241 = vmatmul.mubr.f32.gmra.mrb[0].mxu0 %v13
  %v242 = vpop.f32.mrb[0].mxu0
  %v243 = vadd.f32 0.0, %v242
  %v244 = vpop.f32.mrb[0].mxu0
  %245 = vmatprep.mubr.f32.mxu0 %v16
  %246 = vmatmul.mubr.f32.gmra.mrb[0].mxu0 %v15
  %v247 = vpop.f32.mrb[0].mxu0
  %v248 = vadd.f32 0.0, %v247
  %v249 = vpop.f32.mrb[0].mxu0
  %250 = vmatprep.mubr.f32.mxu0 %v18
  %251 = vmatmul.mubr.f32.gmra.mrb[0].mxu0 %v17
  %v252 = vpop.f32.mrb[0].mxu0
  %v253 = vadd.f32 0.0, %v252
  %v254 = vpop.f32.mrb[0].mxu0
  %255 = vmatprep.mubr.f32.mxu0 %v20
  %256 = vmatmul.mubr.f32.gmra.mrb[0].mxu0 %v19
  %v257 = vpop.f32.mrb[0].mxu0
  %v258 = vadd.f32 0.0, %v257
  %v259 = vpop.f32.mrb[0].mxu0
  %260 = vmatprep.mubr.f32.mxu0 %v22
  %261 = vmatmul.mubr.f32.gmra.mrb[0].mxu0 %v21
  %v262 = vpop.f32.mrb[0].mxu0
  %v263 = vadd.f32 0.0, %v262
  %v264 = vpop.f32.mrb[0].mxu0
  %265 = vmatprep.mubr.f32.mxu0 %v24
  %266 = vmatmul.mubr.f32.gmra.mrb[0].mxu0 %v23
  %v267 = vpop.f32.mrb[0].mxu0
  %v268 = vadd.f32 0.0, %v267
  %v269 = vpop.f32.mrb[0].mxu0
  %270 = vmatprep.mubr.f32.mxu0 %v26
  %271 = vmatmul.mubr.f32.gmra.mrb[0].mxu0 %v25
  %v272 = vpop.f32.mrb[0].mxu0
  %v273 = vadd.f32 0.0, %v272
  %v274 = vpop.f32.mrb[0].mxu0
  %275 = vmatprep.mubr.f32.mxu0 %v28
  %276 = vmatmul.mubr.f32.gmra.mrb[0].mxu0 %v27
  %v277 = vpop.f32.mrb[0].mxu0
  %v278 = vadd.f32 0.0, %v277
  %v279 = vpop.f32.mrb[0].mxu0
  %280 = vmatprep.mubr.f32.mxu0 %v30
  %281 = vmatmul.mubr.f32.gmra.mrb[0].mxu0 %v29
  %v282 = vpop.f32.mrb[0].mxu0
  %v283 = vadd.f32 0.0, %v282
  %v284 = vpop.f32.mrb[0].mxu0
  %285 = vmatprep.mubr.f32.mxu0 %v32
  %286 = vmatmul.mubr.f32.gmra.mrb[0].mxu0 %v31
  %v287 = vpop.f32.mrb[0].mxu0
  %v288 = vadd.f32 0.0, %v287
  %v289 = vpop.f32.mrb[0].mxu0
  %290 = vmatprep.mubr.f32.mxu0 %v34
  %291 = vmatmul.mubr.f32.gmra.mrb[0].mxu0 %v33
  %v292 = vpop.f32.mrb[0].mxu0
  %v293 = vadd.f32 0.0, %v292
  %v294 = vpop.f32.mrb[0].mxu0
  %295 = vmatprep.mubr.f32.mxu0 %v36
  %296 = vmatmul.mubr.f32.gmra.mrb[0].mxu0 %v35
  %v297 = vpop.f32.mrb[0].mxu0
  %v298 = vadd.f32 0.0, %v297
  %v299 = vpop.f32.mrb[0].mxu0
  %300 = vmatprep.mubr.f32.mxu0 %v38
  %301 = vmatmul.mubr.f32.gmra.mrb[0].mxu0 %v37
  %v302 = vpop.f32.mrb[0].mxu0
  %v303 = vadd.f32 0.0, %v302
  %v304 = vpop.f32.mrb[0].mxu0
  %305 = vmatprep.mubr.f32.mxu0 %v40
  %306 = vmatmul.mubr.f32.gmra.mrb[0].mxu0 %v39
  %v307 = vpop.f32.mrb[0].mxu0
  %v308 = vadd.f32 0.0, %v307
  %v309 = vpop.f32.mrb[0].mxu0
  %310 = vmatprep.mubr.f32.mxu0 %v42
  %311 = vmatmul.mubr.f32.gmra.mrb[0].mxu0 %v41
  %v312 = vpop.f32.mrb[0].mxu0
  %v313 = vadd.f32 0.0, %v312
  %v314 = vpop.f32.mrb[0].mxu0
  %315 = vmatprep.mubr.f32.mxu0 %v44
  %316 = vmatmul.mubr.f32.gmra.mrb[0].mxu0 %v43
  %v317 = vpop.f32.mrb[0].mxu0
  %v318 = vadd.f32 0.0, %v317
  %v319 = vpop.f32.mrb[0].mxu0
  %320 = vmatprep.mubr.f32.mxu0 %v46
  %321 = vmatmul.mubr.f32.gmra.mrb[0].mxu0 %v45
  %v322 = vpop.f32.mrb[0].mxu0
  %v323 = vadd.f32 0.0, %v322
  %v324 = vpop.f32.mrb[0].mxu0
  %325 = vmatprep.mubr.f32.mxu0 %v48
  %326 = vmatmul.mubr.f32.gmra.mrb[0].mxu0 %v47
  %v327 = vpop.f32.mrb[0].mxu0
  %v328 = vadd.f32 0.0, %v327
  %v329 = vpop.f32.mrb[0].mxu0
  %330 = vmatprep.mubr.f32.mxu0 %v50
  %331 = vmatmul.mubr.f32.gmra.mrb[0].mxu0 %v49
  %v332 = vpop.f32.mrb[0].mxu0
  %v333 = vadd.f32 0.0, %v332
  %v334 = vpop.f32.mrb[0].mxu0
  %335 = vmatprep.mubr.f32.mxu0 %v52
  %336 = vmatmul.mubr.f32.gmra.mrb[0].mxu0 %v51
  %v337 = vpop.f32.mrb[0].mxu0
  %v338 = vadd.f32 0.0, %v337
  %v339 = vpop.f32.mrb[0].mxu0
  %340 = vmatprep.mubr.f32.mxu0 %v54
  %341 = vmatmul.mubr.f32.gmra.mrb[0].mxu0 %v53
  %v342 = vpop.f32.mrb[0].mxu0
  %v343 = vadd.f32 0.0, %v342
  %v344 = vpop.f32.mrb[0].mxu0
  %345 = vmatprep.mubr.f32.mxu0 %v56
  %346 = vmatmul.mubr.f32.gmra.mrb[0].mxu0 %v55
  %v347 = vpop.f32.mrb[0].mxu0
  %v348 = vadd.f32 0.0, %v347
  %v349 = vpop.f32.mrb[0].mxu0
  %350 = vmatprep.mubr.f32.mxu0 %v58
  %351 = vmatmul.mubr.f32.gmra.mrb[0].mxu0 %v57
  %v352 = vpop.f32.mrb[0].mxu0
  %v353 = vadd.f32 0.0, %v352
  %v354 = vpop.f32.mrb[0].mxu0
  %355 = vmatprep.mubr.f32.mxu0 %v60
  %356 = vmatmul.mubr.f32.gmra.mrb[0].mxu0 %v59
  %v357 = vpop.f32.mrb[0].mxu0
  %v358 = vadd.f32 0.0, %v357
  %v359 = vpop.f32.mrb[0].mxu0
  %360 = vmatprep.mubr.f32.mxu0 %v62
  %361 = vmatmul.mubr.f32.gmra.mrb[0].mxu0 %v61
  %v362 = vpop.f32.mrb[0].mxu0
  %v363 = vadd.f32 0.0, %v362
  %v364 = vpop.f32.mrb[0].mxu0
  %365 = vmatprep.mubr.f32.mxu0 %v64
  %366 = vmatmul.mubr.f32.gmra.mrb[0].mxu0 %v63
  %v367 = vpop.f32.mrb[0].mxu0
  %v368 = vadd.f32 0.0, %v367
  %v369 = vpop.f32.mrb[0].mxu0
  %370 = vmatprep.mubr.f32.mxu0 %v66
  %371 = vmatmul.mubr.f32.gmra.mrb[0].mxu0 %v65
  %v372 = vpop.f32.mrb[0].mxu0
  %v373 = vadd.f32 0.0, %v372
  %v374 = vpop.f32.mrb[0].mxu0
  %375 = vmatprep.mubr.f32.mxu0 %v68
  %376 = vmatmul.mubr.f32.gmra.mrb[0].mxu0 %v67
  %v377 = vpop.f32.mrb[0].mxu0
  %v378 = vadd.f32 0.0, %v377
  %v379 = vpop.f32.mrb[0].mxu0
  %380 = vmatprep.mubr.f32.mxu0 %v70
  %381 = vmatmul.mubr.f32.gmra.mrb[0].mxu0 %v69
  %v382 = vpop.f32.mrb[0].mxu0
  %v383 = vadd.f32 0.0, %v382
  %v384 = vpop.f32.mrb[0].mxu0
  %385 = vmatprep.mubr.f32.mxu0 %v72
  %386 = vmatmul.mubr.f32.gmra.mrb[0].mxu0 %v71
  %v387 = vpop.f32.mrb[0].mxu0
  %v388 = vadd.f32 0.0, %v387
  %v389 = vpop.f32.mrb[0].mxu0
  %390 = vmatprep.mubr.f32.mxu0 %v74
  %391 = vmatmul.mubr.f32.gmra.mrb[0].mxu0 %v73
  %v392 = vpop.f32.mrb[0].mxu0
  %v393 = vadd.f32 0.0, %v392
  %v394 = vpop.f32.mrb[0].mxu0
  %395 = vmatprep.mubr.f32.mxu0 %v76
  %396 = vmatmul.mubr.f32.gmra.mrb[0].mxu0 %v75
  %v397 = vpop.f32.mrb[0].mxu0
  %v398 = vadd.f32 0.0, %v397
  %v399 = vpop.f32.mrb[0].mxu0
  %400 = vmatprep.mubr.f32.mxu0 %v78
  %401 = vmatmul.mubr.f32.gmra.mrb[0].mxu0 %v77
  %v402 = vpop.f32.mrb[0].mxu0
  %v403 = vadd.f32 0.0, %v402
  %v404 = vpop.f32.mrb[0].mxu0
  %405 = vmatprep.mubr.f32.mxu0 %v80
  %406 = vmatmul.mubr.f32.gmra.mrb[0].mxu0 %v79
  %v407 = vpop.f32.mrb[0].mxu0
  %v408 = vadd.f32 0.0, %v407
  %v409 = vpop.f32.mrb[0].mxu0
  %410 = vmatprep.mubr.f32.mxu0 %v82
  %411 = vmatmul.mubr.f32.gmra.mrb[0].mxu0 %v81
  %v412 = vpop.f32.mrb[0].mxu0
  %v413 = vadd.f32 0.0, %v412
  %v414 = vpop.f32.mrb[0].mxu0
  %415 = vmatprep.mubr.f32.mxu0 %v84
  %416 = vmatmul.mubr.f32.gmra.mrb[0].mxu0 %v83
  %v417 = vpop.f32.mrb[0].mxu0
  %v418 = vadd.f32 0.0, %v417
  %v419 = vpop.f32.mrb[0].mxu0
  %420 = vmatprep.mubr.f32.mxu0 %v86
  %421 = vmatmul.mubr.f32.gmra.mrb[0].mxu0 %v85
  %v422 = vpop.f32.mrb[0].mxu0
  %v423 = vadd.f32 0.0, %v422
  %v424 = vpop.f32.mrb[0].mxu0
  %425 = vmatprep.mubr.f32.mxu0 %v88
  %426 = vmatmul.mubr.f32.gmra.mrb[0].mxu0 %v87
  %v427 = vpop.f32.mrb[0].mxu0
  %v428 = vadd.f32 0.0, %v427
  %v429 = vpop.f32.mrb[0].mxu0
  %430 = vmatprep.mubr.f32.mxu0 %v90
  %431 = vmatmul.mubr.f32.gmra.mrb[0].mxu0 %v89
  %v432 = vpop.f32.mrb[0].mxu0
  %v433 = vadd.f32 0.0, %v432
  %v434 = vpop.f32.mrb[0].mxu0
  %435 = vmatprep.mubr.f32.mxu0 %v92
  %436 = vmatmul.mubr.f32.gmra.mrb[0].mxu0 %v91
  %v437 = vpop.f32.mrb[0].mxu0
  %v438 = vadd.f32 0.0, %v437
  %v439 = vpop.f32.mrb[0].mxu0
  %440 = vmatprep.mubr.f32.mxu0 %v94
  %441 = vmatmul.mubr.f32.gmra.mrb[0].mxu0 %v93
  %v442 = vpop.f32.mrb[0].mxu0
  %v443 = vadd.f32 0.0, %v442
  %v444 = vpop.f32.mrb[0].mxu0
  %445 = vmatprep.mubr.f32.mxu0 %v96
  %446 = vmatmul.mubr.f32.gmra.mrb[0].mxu0 %v95
  %v447 = vpop.f32.mrb[0].mxu0
  %v448 = vadd.f32 0.0, %v447
  %v449 = vpop.f32.mrb[0].mxu0
  %450 = vmatprep.mubr.f32.mxu0 %v98
  %451 = vmatmul.mubr.f32.gmra.mrb[0].mxu0 %v97
  %v452 = vpop.f32.mrb[0].mxu0
  %v453 = vadd.f32 0.0, %v452
  %v454 = vpop.f32.mrb[0].mxu0
  %455 = vmatprep.mubr.f32.mxu0 %v100
  %456 = vmatmul.mubr.f32.gmra.mrb[0].mxu0 %v99
  %v457 = vpop.f32.mrb[0].mxu0
  %v458 = vadd.f32 0.0, %v457
  %v459 = vpop.f32.mrb[0].mxu0
  %460 = vmatprep.mubr.f32.mxu0 %v102
  %461 = vmatmul.mubr.f32.gmra.mrb[0].mxu0 %v101
  %v462 = vpop.f32.mrb[0].mxu0
  %v463 = vadd.f32 0.0, %v462
  %v464 = vpop.f32.mrb[0].mxu0
  %465 = vmatprep.mubr.f32.mxu0 %v104
  %466 = vmatmul.mubr.f32.gmra.mrb[0].mxu0 %v103
  %v467 = vpop.f32.mrb[0].mxu0
  %v468 = vadd.f32 0.0, %v467
  %v469 = vpop.f32.mrb[0].mxu0
  %470 = vmatprep.mubr.f32.mxu0 %v106
  %471 = vmatmul.mubr.f32.gmra.mrb[0].mxu0 %v105
  %v472 = vpop.f32.mrb[0].mxu0
  %v473 = vadd.f32 0.0, %v472
  %v474 = vpop.f32.mrb[0].mxu0
  %475 = vmatprep.mubr.f32.mxu0 %v108
  %476 = vmatmul.mubr.f32.gmra.mrb[0].mxu0 %v107
  %v477 = vpop.f32.mrb[0].mxu0
  %v478 = vadd.f32 0.0, %v477
  %v479 = vpop.f32.mrb[0].mxu0
  %480 = vmatprep.mubr.f32.mxu0 %v110
  %481 = vmatmul.mubr.f32.gmra.mrb[0].mxu0 %v109
  %v482 = vpop.f32.mrb[0].mxu0
  %v483 = vadd.f32 0.0, %v482
  %v484 = vpop.f32.mrb[0].mxu0
  %485 = vmatprep.mubr.f32.mxu0 %v112
  %486 = vmatmul.mubr.f32.gmra.mrb[0].mxu0 %v111
  %v487 = vpop.f32.mrb[0].mxu0
  %v488 = vadd.f32 0.0, %v487
  %v489 = vpop.f32.mrb[0].mxu0
  %490 = vmatprep.mubr.f32.mxu0 %v114
  %491 = vmatmul.mubr.f32.gmra.mrb[0].mxu0 %v113
  %v492 = vpop.f32.mrb[0].mxu0
  %v493 = vadd.f32 0.0, %v492
  %v494 = vpop.f32.mrb[0].mxu0
  %495 = vmatprep.mubr.f32.mxu0 %v116
  %496 = vmatmul.mubr.f32.gmra.mrb[0].mxu0 %v115
  %v497 = vpop.f32.mrb[0].mxu0
  %v498 = vadd.f32 0.0, %v497
  %v499 = vpop.f32.mrb[0].mxu0
  %500 = vmatprep.mubr.f32.mxu0 %v118
  %501 = vmatmul.mubr.f32.gmra.mrb[0].mxu0 %v117
  %v502 = vpop.f32.mrb[0].mxu0
  %v503 = vadd.f32 0.0, %v502
  %v504 = vpop.f32.mrb[0].mxu0
  %505 = vmatprep.mubr.f32.mxu0 %v120
  %506 = vmatmul.mubr.f32.gmra.mrb[0].mxu0 %v119
  %v507 = vpop.f32.mrb[0].mxu0
  %v508 = vadd.f32 0.0, %v507
  %v509 = vpop.f32.mrb[0].mxu0
  %510 = vmatprep.mubr.f32.mxu0 %v122
  %511 = vmatmul.mubr.f32.gmra.mrb[0].mxu0 %v121
  %v512 = vpop.f32.mrb[0].mxu0
  %v513 = vadd.f32 0.0, %v512
  %v514 = vpop.f32.mrb[0].mxu0
  %515 = vmatprep.mubr.f32.mxu0 %v124
  %516 = vmatmul.mubr.f32.gmra.mrb[0].mxu0 %v123
  %v517 = vpop.f32.mrb[0].mxu0
  %v518 = vadd.f32 0.0, %v517
  %v519 = vpop.f32.mrb[0].mxu0
  %520 = vmatprep.mubr.f32.mxu0 %v126
  %521 = vmatmul.mubr.f32.gmra.mrb[0].mxu0 %v125
  %v522 = vpop.f32.mrb[0].mxu0
  %v523 = vadd.f32 0.0, %v522
  %v524 = vpop.f32.mrb[0].mxu0
  %525 = vmatprep.mubr.f32.mxu0 %v128
  %526 = vmatmul.mubr.f32.gmra.mrb[0].mxu0 %v127
  %v527 = vpop.f32.mrb[0].mxu0
  %v528 = vadd.f32 0.0, %v527
  %v529 = vpop.f32.mrb[0].mxu0
  %530 = vmatprep.mubr.f32.mxu0 %v130
  %531 = vmatmul.mubr.f32.gmra.mrb[0].mxu0 %v129
  %v532 = vpop.f32.mrb[0].mxu0
  %v533 = vadd.f32 0.0, %v532
  %v534 = vpop.f32.mrb[0].mxu0
  %535 = vmatprep.mubr.f32.mxu0 %v132
  %536 = vmatmul.mubr.f32.gmra.mrb[0].mxu0 %v131
  %v537 = vpop.f32.mrb[0].mxu0
  %v538 = vadd.f32 0.0, %v537
  %v539 = vpop.f32.mrb[0].mxu0
  %540 = vmatprep.mubr.f32.mxu0 %v134
  %541 = vmatmul.mubr.f32.gmra.mrb[0].mxu0 %v133
  %v542 = vpop.f32.mrb[0].mxu0
  %v543 = vadd.f32 0.0, %v542
  %v544 = vpop.f32.mrb[0].mxu0
  %545 = vmatprep.mubr.f32.mxu0 %v136
  %546 = vmatmul.mubr.f32.gmra.mrb[0].mxu0 %v135
  %v547 = vpop.f32.mrb[0].mxu0
  %v548 = vadd.f32 0.0, %v547
  %v549 = vpop.f32.mrb[0].mxu0
  %550 = vmatprep.mubr.f32.mxu0 %v138
  %551 = vmatmul.mubr.f32.gmra.mrb[0].mxu0 %v137
  %v552 = vpop.f32.mrb[0].mxu0
  %v553 = vadd.f32 0.0, %v552
  %v554 = vpop.f32.mrb[0].mxu0
  %555 = vdwg.mxu0
  %vm556 = vcmask 523264
  %557 = vst.msk [vmem:[%s2] sm:$0xff] %vm556, %v238
  %558 = vst.msk [vmem:[%s2 + $0x8] sm:$0xff] %vm556, %v243
  %559 = vst.msk [vmem:[%s2 + $0x10] sm:$0xff] %vm556, %v248
  %560 = vst.msk [vmem:[%s2 + $0x18] sm:$0xff] %vm556, %v253
  %561 = vst.msk [vmem:[%s2 + $0x20] sm:$0xff] %vm556, %v258
  %562 = vst.msk [vmem:[%s2 + $0x28] sm:$0xff] %vm556, %v263
  %563 = vst.msk [vmem:[%s2 + $0x30] sm:$0xff] %vm556, %v268
  %564 = vst.msk [vmem:[%s2 + $0x38] sm:$0xff] %vm556, %v273
  %565 = vst.msk [vmem:[%s2 + $0x40] sm:$0xff] %vm556, %v278
  %566 = vst.msk [vmem:[%s2 + $0x48] sm:$0xff] %vm556, %v283
  %567 = vst.msk [vmem:[%s2 + $0x50] sm:$0xff] %vm556, %v288
  %568 = vst.msk [vmem:[%s2 + $0x58] sm:$0xff] %vm556, %v293
  %569 = vst.msk [vmem:[%s2 + $0x60] sm:$0xff] %vm556, %v298
  %570 = vst.msk [vmem:[%s2 + $0x68] sm:$0xff] %vm556, %v303
  %571 = vst.msk [vmem:[%s2 + $0x70] sm:$0xff] %vm556, %v308
  %572 = vst.msk [vmem:[%s2 + $0x78] sm:$0xff] %vm556, %v313
  %573 = vst.msk [vmem:[%s2 + $0x80] sm:$0xff] %vm556, %v318
  %574 = vst.msk [vmem:[%s2 + $0x88] sm:$0xff] %vm556, %v323
  %575 = vst.msk [vmem:[%s2 + $0x90] sm:$0xff] %vm556, %v328
  %576 = vst.msk [vmem:[%s2 + $0x98] sm:$0xff] %vm556, %v333
  %577 = vst.msk [vmem:[%s2 + $0xa0] sm:$0xff] %vm556, %v338
  %578 = vst.msk [vmem:[%s2 + $0xa8] sm:$0xff] %vm556, %v343
  %579 = vst.msk [vmem:[%s2 + $0xb0] sm:$0xff] %vm556, %v348
  %580 = vst.msk [vmem:[%s2 + $0xb8] sm:$0xff] %vm556, %v353
  %581 = vst.msk [vmem:[%s2 + $0xc0] sm:$0xff] %vm556, %v358
  %582 = vst.msk [vmem:[%s2 + $0xc8] sm:$0xff] %vm556, %v363
  %583 = vst.msk [vmem:[%s2 + $0xd0] sm:$0xff] %vm556, %v368
  %584 = vst.msk [vmem:[%s2 + $0xd8] sm:$0xff] %vm556, %v373
  %585 = vst.msk [vmem:[%s2 + $0xe0] sm:$0xff] %vm556, %v378
  %586 = vst.msk [vmem:[%s2 + $0xe8] sm:$0xff] %vm556, %v383
  %587 = vst.msk [vmem:[%s2 + $0xf0] sm:$0xff] %vm556, %v388
  %588 = vst.msk [vmem:[%s2 + $0xf8] sm:$0xff] %vm556, %v393
  %589 = vst.msk [vmem:[%s2 + $0x100] sm:$0xff] %vm556, %v398
  %590 = vst.msk [vmem:[%s2 + $0x108] sm:$0xff] %vm556, %v403
  %591 = vst.msk [vmem:[%s2 + $0x110] sm:$0xff] %vm556, %v408
  %592 = vst.msk [vmem:[%s2 + $0x118] sm:$0xff] %vm556, %v413
  %593 = vst.msk [vmem:[%s2 + $0x120] sm:$0xff] %vm556, %v418
  %594 = vst.msk [vmem:[%s2 + $0x128] sm:$0xff] %vm556, %v423
  %595 = vst.msk [vmem:[%s2 + $0x130] sm:$0xff] %vm556, %v428
  %596 = vst.msk [vmem:[%s2 + $0x138] sm:$0xff] %vm556, %v433
  %597 = vst.msk [vmem:[%s2 + $0x140] sm:$0xff] %vm556, %v438
  %598 = vst.msk [vmem:[%s2 + $0x148] sm:$0xff] %vm556, %v443
  %599 = vst.msk [vmem:[%s2 + $0x150] sm:$0xff] %vm556, %v448
  %600 = vst.msk [vmem:[%s2 + $0x158] sm:$0xff] %vm556, %v453
  %601 = vst.msk [vmem:[%s2 + $0x160] sm:$0xff] %vm556, %v458
  %602 = vst.msk [vmem:[%s2 + $0x168] sm:$0xff] %vm556, %v463
  %603 = vst.msk [vmem:[%s2 + $0x170] sm:$0xff] %vm556, %v468
  %604 = vst.msk [vmem:[%s2 + $0x178] sm:$0xff] %vm556, %v473
  %605 = vst.msk [vmem:[%s2 + $0x180] sm:$0xff] %vm556, %v478
  %606 = vst.msk [vmem:[%s2 + $0x188] sm:$0xff] %vm556, %v483
  %607 = vst.msk [vmem:[%s2 + $0x190] sm:$0xff] %vm556, %v488
  %608 = vst.msk [vmem:[%s2 + $0x198] sm:$0xff] %vm556, %v493
  %609 = vst.msk [vmem:[%s2 + $0x1a0] sm:$0xff] %vm556, %v498
  %610 = vst.msk [vmem:[%s2 + $0x1a8] sm:$0xff] %vm556, %v503
  %611 = vst.msk [vmem:[%s2 + $0x1b0] sm:$0xff] %vm556, %v508
  %612 = vst.msk [vmem:[%s2 + $0x1b8] sm:$0xff] %vm556, %v513
  %613 = vst.msk [vmem:[%s2 + $0x1c0] sm:$0xff] %vm556, %v518
  %614 = vst.msk [vmem:[%s2 + $0x1c8] sm:$0xff] %vm556, %v523
  %615 = vst.msk [vmem:[%s2 + $0x1d0] sm:$0xff] %vm556, %v528
  %616 = vst.msk [vmem:[%s2 + $0x1d8] sm:$0xff] %vm556, %v533
  %617 = vst.msk [vmem:[%s2 + $0x1e0] sm:$0xff] %vm556, %v538
  %618 = vst.msk [vmem:[%s2 + $0x1e8] sm:$0xff] %vm556, %v543
  %619 = vst.msk [vmem:[%s2 + $0x1f0] sm:$0xff] %vm556, %v548
  %620 = vst.msk [vmem:[%s2 + $0x1f8] sm:$0xff] %vm556, %v553
  // Predicated region
  $region10: #{depth_to_space_upsample_forward.1} parent=0 // pred_check
    _
  $region11: #{depth_to_space_upsample_forward.1} parent=0 // pred_check_branch
    %622 = sbr.rel (0) target = $region13
  $region12: #{depth_to_space_upsample_forward.1} parent=0 // pred_region
    _
  $region13: #{depth_to_space_upsample_forward.1} parent=0 // pred_fallthru
    _
  // Predicated region
  $region14: #{depth_to_space_upsample_forward.1} parent=0 // pred_check
    _
  $region15: #{depth_to_space_upsample_forward.1} parent=0 // pred_check_branch
    %624 = sbr.rel (0) target = $region17
  $region16: #{depth_to_space_upsample_forward.1} parent=0 // pred_region
    _
  $region17: #{depth_to_space_upsample_forward.1} parent=0 // pred_fallthru
    _

</llo_original>
